<compile_context>
chip_gen: v5e
topology: v5e:2x2
jax: 0.10.0
libtpu: 0.0.40
codegen_flags: <defaults>
</compile_context>

<pallas_src>
import math

import jax
import jax.numpy as jnp
from jax.experimental import pallas as pl
from jax.experimental.pallas import tpu as pltpu


def _ape_kernel(t_ref, s_ref, f_ref, p_ref, o_ref):
    # t_ref: (TN, 3*F) bf16   three bf16-exact components per folded timestep
    # s_ref: (3*F, F*D) bf16  0/1 block-diagonal selector (grid-resident)
    # f_ref: (1, F*D) f32     inv_freq tiled F times (grid-resident)
    # p_ref: (1, F*D) f32     phase: 0 (even lanes) / pi/2 (odd lanes) (resident)
    # o_ref: (TN, F*D) f32
    #
    # MXU expands each folded timestep across its D lanes (exactly, since every
    # product is bf16-exact * {0,1} with f32 accumulation); VPU applies the
    # frequency scale + phase and the sin polynomial.
    texp = jnp.dot(t_ref[...], s_ref[...], preferred_element_type=jnp.float32)
    o_ref[...] = jnp.sin(texp * f_ref[...] + p_ref[...]).astype(o_ref.dtype)


def _round_up(x: int, m: int) -> int:
    return -(-x // m) * m


def absolute_positional_encoding(timesteps: jax.Array, hidden_dim: int) -> jax.Array:
    """timesteps: arbitrary shape; returns timesteps.shape + (hidden_dim,), f32."""
    assert hidden_dim % 2 == 0, "hidden_dim must be even (sin/cos pairing)"
    d = hidden_dim
    orig_shape = timesteps.shape
    t_flat = timesteps.reshape(-1).astype(jnp.float32)
    n = t_flat.shape[0]

    if n == 0:  # empty input: nothing to launch
        return jnp.zeros(orig_shape + (d,), jnp.float32)

    # Per-lane inverse frequency and phase, computed once in the wrapper.
    lane = jnp.arange(d)
    two_i = (2 * (lane // 2)).astype(jnp.float32)
    inv_freq = 1.0 / (10000.0 ** (two_i / jnp.float32(d)))                      # (D,)
    phase = jnp.where(lane % 2 == 0, 0.0, math.pi / 2.0).astype(jnp.float32)    # (D,)

    # Fold enough timesteps per output row that the lane width is a multiple
    # of 128 (dense stores).  The fold expansion is on the MXU, so no cap.
    fold = 1 if d % 128 == 0 else 128 // math.gcd(d, 128)
    fd = fold * d
    kdim = 3 * fold

    # Grid-resident constants.
    sel = jnp.kron(jnp.eye(fold, dtype=jnp.float32),
                   jnp.ones((3, d), jnp.float32)).astype(jnp.bfloat16)          # (3F, FD)
    f_row = jnp.tile(inv_freq, fold).reshape(1, fd)                             # (1, FD)
    p_row = jnp.tile(phase, fold).reshape(1, fd)                                # (1, FD)

    # Rows after folding; pad only to the sublane multiple of 8 (NOT to tn).
    m_raw = -(-n // fold)
    m = _round_up(max(m_raw, 8), 8)
    n_pad = m * fold
    t_pad = jnp.pad(t_flat, (0, n_pad - n))

    # Split each timestep into three bf16-exact components (t0 + t1 + t2 == t
    # to f32 accuracy; Sterbenz subtractions are exact), so the MXU products
    # with the 0/1 selector are exact regardless of matmul input precision.
    t0 = t_pad.astype(jnp.bfloat16)
    r1 = t_pad - t0.astype(jnp.float32)
    t1 = r1.astype(jnp.bfloat16)
    t2 = (r1 - t1.astype(jnp.float32)).astype(jnp.bfloat16)
    t_split = jnp.stack([t0, t1, t2], axis=-1).reshape(m, kdim)                 # (m, 3F) bf16

    # Row tile: ~4 MiB output blocks; rows a multiple of 16 (bf16 sublane
    # packing on the t operand); capped so the grid has >=2 steps whenever the
    # problem is large enough, so both v7x TensorCores get grid steps.
    # VMEM budget: 2x out block + 2x lane-padded t block + resident constants
    # stays well under the 32 MiB scoped limit on all generations.
    row_bytes = 4 * fd
    target_block_bytes = 4 * 1024 * 1024
    if m <= 16:
        tn = m                                  # single block == full array dims
    else:
        tn = max(16, min(4096, (target_block_bytes // row_bytes) // 16 * 16))
        tn = min(tn, _round_up(-(-m // 2), 16))  # guarantee >= 2 grid steps
    grid = (pl.cdiv(m, tn),)

    cost = pl.CostEstimate(
        flops=2 * m * kdim * fd + 2 * m * fd,
        transcendentals=m * fd,
        bytes_accessed=2 * m * kdim + 2 * kdim * fd + 4 * 2 * fd + 4 * m * fd,
    )

    out = pl.pallas_call(
        _ape_kernel,
        out_shape=jax.ShapeDtypeStruct((m, fd), jnp.float32),
        grid_spec=pltpu.PrefetchScalarGridSpec(
            num_scalar_prefetch=0,
            grid=grid,
            in_specs=[
                pl.BlockSpec((tn, kdim), lambda i: (i, 0)),
                pl.BlockSpec((kdim, fd), lambda i: (0, 0)),   # resident constant
                pl.BlockSpec((1, fd), lambda i: (0, 0)),      # resident constant
                pl.BlockSpec((1, fd), lambda i: (0, 0)),      # resident constant
            ],
            out_specs=pl.BlockSpec((tn, fd), lambda i: (i, 0)),
        ),
        compiler_params=pltpu.CompilerParams(
            dimension_semantics=("parallel",),
            vmem_limit_bytes=32 * 1024 * 1024,
        ),
        cost_estimate=cost,
    )(t_split, sel, f_row, p_row)

    # (m, fold*D) -> (n, D); the slice is skipped when nothing was padded.
    out = out.reshape(n_pad, d)
    if n_pad != n:
        out = out[:n]
    return out.reshape(orig_shape + (d,))


def _reference(timesteps: jax.Array, hidden_dim: int) -> jax.Array:
    # Pure-JAX replica of the PyTorch forward, for verification.
    _2i = jnp.arange(0, hidden_dim, 2, dtype=jnp.float32)
    t = timesteps.astype(jnp.float32)[..., None]
    t = jnp.broadcast_to(t, t.shape[:-1] + _2i.shape)
    denom = 10000.0 ** (_2i / hidden_dim)
    even = jnp.sin(t / denom)
    odd = jnp.cos(t / denom)
    return jnp.stack([even, odd], axis=-1).reshape(t.shape[:-1] + (hidden_dim,))


if __name__ == "__main__":
    batch, seq, hidden = 2, 8, 32
    key = jax.random.PRNGKey(0)
    timesteps = jax.random.uniform(key, (batch, seq), dtype=jnp.float32) * 1000.0

    out = jax.block_until_ready(absolute_positional_encoding(timesteps, hidden))
    ref = _reference(timesteps, hidden)
    assert out.shape == (batch, seq, hidden), out.shape
    # single-sin (cos(x)=sin(x+pi/2)) + mul-vs-div differences at |arg|~1e3 stay well below 5e-4
    assert jnp.allclose(out, ref, atol=5e-4, rtol=1e-4), float(jnp.max(jnp.abs(out - ref)))

    # Ragged size exercises the fold/row-padding path (n not a multiple of fold).
    t2 = jax.random.uniform(jax.random.PRNGKey(1), (3, 5), dtype=jnp.float32) * 1000.0
    out2 = jax.block_until_ready(absolute_positional_encoding(t2, hidden))
    ref2 = _reference(t2, hidden)
    assert out2.shape == (3, 5, hidden), out2.shape
    assert jnp.allclose(out2, ref2, atol=5e-4, rtol=1e-4), float(jnp.max(jnp.abs(out2 - ref2)))

    # D a multiple of 128 -> fold == 1 path with a multi-step (megacore-able) grid.
    t3 = jax.random.uniform(jax.random.PRNGKey(2), (8, 8), dtype=jnp.float32) * 1000.0
    out3 = jax.block_until_ready(absolute_positional_encoding(t3, 128))
    ref3 = _reference(t3, 128)
    assert out3.shape == (8, 8, 128), out3.shape
    assert jnp.allclose(out3, ref3, atol=5e-4, rtol=1e-4), float(jnp.max(jnp.abs(out3 - ref3)))

    print("KERNEL_OK")
</pallas_src>

<mosaic_0001>
module attributes {stable_mosaic.version = 11 : i64} {
  func.func @_ape_kernel(%arg0: i32, %arg1: memref<8x12xbf16, #tpu.memory_space<vmem>>, %arg2: memref<12x128xbf16, #tpu.memory_space<vmem>>, %arg3: memref<1x128xf32, #tpu.memory_space<vmem>>, %arg4: memref<1x128xf32, #tpu.memory_space<vmem>>, %arg5: memref<8x128xf32, #tpu.memory_space<vmem>>) attributes {dimension_semantics = [#tpu.dimension_semantics<parallel>], iteration_bounds = array<i64: 1>, scalar_prefetch = 0 : i64, scratch_operands = 0 : i64, tpu.core_type = #tpu.core_type<tc>, window_params = [{transform_indices = @transform_0, window_bounds = array<i64: 8, 12>}, {pipeline_mode = #tpu.pipeline_mode<synchronous>, transform_indices = @transform_1, window_bounds = array<i64: 12, 128>}, {pipeline_mode = #tpu.pipeline_mode<synchronous>, transform_indices = @transform_2, window_bounds = array<i64: 1, 128>}, {pipeline_mode = #tpu.pipeline_mode<synchronous>, transform_indices = @transform_3, window_bounds = array<i64: 1, 128>}, {transform_indices = @transform_4, window_bounds = array<i64: 8, 128>}]} {
    %c0 = arith.constant 0 : index
    %c0_0 = arith.constant 0 : index
    %0 = vector.load %arg1[%c0, %c0_0] : memref<8x12xbf16, #tpu.memory_space<vmem>>, vector<8x12xbf16>
    %c0_1 = arith.constant 0 : index
    %c0_2 = arith.constant 0 : index
    %1 = vector.load %arg2[%c0_1, %c0_2] : memref<12x128xbf16, #tpu.memory_space<vmem>>, vector<12x128xbf16>
    %cst = arith.constant dense<0.000000e+00> : vector<8x128xf32>
    %2 = tpu.matmul %0, %1, %cst {dimension_numbers = #tpu.dot_dimension_numbers<[1], [0], [0], [1], [0, 0, 1, 1], [], []>} : vector<8x12xbf16>, vector<12x128xbf16>, vector<8x128xf32> -> vector<8x128xf32>
    %c0_3 = arith.constant 0 : index
    %c0_4 = arith.constant 0 : index
    %3 = vector.load %arg3[%c0_3, %c0_4] : memref<1x128xf32, #tpu.memory_space<vmem>>, vector<1x128xf32>
    %4 = vector.broadcast %3 : vector<1x128xf32> to vector<8x128xf32>
    %5 = arith.mulf %2, %4 : vector<8x128xf32>
    %c0_5 = arith.constant 0 : index
    %c0_6 = arith.constant 0 : index
    %6 = vector.load %arg4[%c0_5, %c0_6] : memref<1x128xf32, #tpu.memory_space<vmem>>, vector<1x128xf32>
    %7 = vector.broadcast %6 : vector<1x128xf32> to vector<8x128xf32>
    %8 = arith.addf %5, %7 : vector<8x128xf32>
    %9 = math.sin %8 : vector<8x128xf32>
    %c0_7 = arith.constant 0 : index
    %c0_8 = arith.constant 0 : index
    %10 = vector.load %arg5[%c0_7, %c0_8] : memref<8x128xf32, #tpu.memory_space<vmem>>, vector<8x128xf32>
    tpu.vector_store %arg5[%c0_7, %c0_8], %9 {strides = array<i32>} : memref<8x128xf32, #tpu.memory_space<vmem>>, vector<8x128xf32>,
    return
  }
  func.func @transform_0(%arg0: i32) -> (i32, i32) {
    %c0_i32 = arith.constant 0 : i32
    %c0_i32_0 = arith.constant 0 : i32
    return %arg0, %c0_i32 : i32, i32
  }
  func.func @transform_1(%arg0: i32) -> (i32, i32) {
    %c0_i32 = arith.constant 0 : i32
    %c0_i32_0 = arith.constant 0 : i32
    %c0_i32_1 = arith.constant 0 : i32
    return %c0_i32, %c0_i32_0 : i32, i32
  }
  func.func @transform_2(%arg0: i32) -> (i32, i32) {
    %c0_i32 = arith.constant 0 : i32
    %c0_i32_0 = arith.constant 0 : i32
    %c0_i32_1 = arith.constant 0 : i32
    return %c0_i32, %c0_i32_0 : i32, i32
  }
  func.func @transform_3(%arg0: i32) -> (i32, i32) {
    %c0_i32 = arith.constant 0 : i32
    %c0_i32_0 = arith.constant 0 : i32
    %c0_i32_1 = arith.constant 0 : i32
    return %c0_i32, %c0_i32_0 : i32, i32
  }
  func.func @transform_4(%arg0: i32) -> (i32, i32) {
    %c0_i32 = arith.constant 0 : i32
    %c0_i32_0 = arith.constant 0 : i32
    return %arg0, %c0_i32 : i32, i32
  }
}

</mosaic_0001>

<llo_original>
// kernel: tpu_custom_call.1
$region0: #{tpu_custom_call.1}
  #allocation0 [shape = 'u32[]', space=smem, size = 0x4, offset = 0x4, fixed_abs, tag = 'smem constant byte address 0x4 - core index']
  #allocation1 [shape = 'u32[72,128]{1,0:T(1,128)}', space=vmem, size = 0x9000, scoped, tag = 'internal scratch']
  %s0 = inlined_call_operand.hbm [shape: bf16[8,12], index: 0, kind: input, shape index: {}]
  %s1 = inlined_call_operand.hbm [shape: bf16[12,128], index: 1, kind: input, shape index: {}]
  %s2 = inlined_call_operand.vmem [shape: f32[1,128], index: 2, kind: input, shape index: {}]
  %s3 = inlined_call_operand.vmem [shape: f32[1,128], index: 3, kind: input, shape index: {}]
  %s4 = inlined_call_operand.hbm [shape: f32[8,128], index: 4, kind: output, shape index: {}]
  %s5 = sld [smem:[#allocation0]]
  $region34: #{tpu_custom_call.1} parent=0
    _
  %s7 = ssub.s32 1, %s5
  %s8 = scalar_select 0, %s7, %s5
  $region1: #{tpu_custom_call.1} parent=0
    #allocation2 [shape = 'u8[2048]{0}', space=vmem, size = 0x800, scoped, tag = 'input window, operand 0, single buffered']
    #allocation3 [shape = 's32[1]{0}', space=sflag, size = 0x4, scoped, tag = 'scoped memory for tpu_custom_call.1']
    #allocation4 [shape = 's32[1]{0}', space=sflag, size = 0x4, scoped, tag = 'scoped memory for tpu_custom_call.1']
    #allocation5 [shape = 'u8[4096]{0}', space=vmem, size = 0x1000, scoped, tag = 'input window, operand 1, single buffered']
    #allocation6 [shape = 's32[1]{0}', space=sflag, size = 0x4, scoped, tag = 'scoped memory for tpu_custom_call.1']
    #allocation7 [shape = 'u8[4096]{0}', space=vmem, size = 0x1000, scoped, tag = 'output window, operand 0, single buffered']
    %9 = vsyncpa [#allocation3], 0
    %10 = vsyncpa [#allocation6], 0
    %11 = vsyncpa [#allocation4], 0
    // Predicated region
    $region2: #{tpu_custom_call.1} parent=1 // pred_check
      _
    $region3: #{tpu_custom_call.1} parent=1 // pred_check_branch
      %13 = sbr.rel (0) target = $region5
    $region4: #{tpu_custom_call.1} parent=1 // pred_region
      %15 = vsyncadd [#allocation3], 0
      %s17 = sshll.u32 %s0, 4
      %s18 = int_to_ptr.hbm [resolvable:$true] %s17
      %s19 = sshll.u32 [#allocation2], 4
      %s20 = int_to_ptr.vmem [resolvable:$true] %s19
      %22 = dma.hbm_to_vmem [thread:$0]  %s18, 64, %s20, [#allocation3]
    $region5: #{tpu_custom_call.1} parent=1 // pred_fallthru
      _
    // Predicated region
    $region6: #{tpu_custom_call.1} parent=1 // pred_check
      _
    $region7: #{tpu_custom_call.1} parent=1 // pred_check_branch
      %24 = sbr.rel (0) target = $region9
    $region8: #{tpu_custom_call.1} parent=1 // pred_region
      %26 = vsyncadd [#allocation6], 0
      %s27 = sshll.u32 %s1, 4
      %s28 = int_to_ptr.hbm [resolvable:$true] %s27
      %s29 = sshll.u32 [#allocation5], 4
      %s30 = int_to_ptr.vmem [resolvable:$true] %s29
      %35 = dma.hbm_to_vmem [thread:$0]  %s28, 128, %s30, [#allocation6], 64, 64, 4
    $region9: #{tpu_custom_call.1} parent=1 // pred_fallthru
      _
    // Predicated region
    $region10: #{tpu_custom_call.1} parent=1 // pred_check
      _
    $region11: #{tpu_custom_call.1} parent=1 // pred_check_branch
      %37 = sbr.rel (0) target = $region13
    $region12: #{tpu_custom_call.1} parent=1 // pred_region
      _
    $region13: #{tpu_custom_call.1} parent=1 // pred_fallthru
      _
    // Predicated region
    $region14: #{tpu_custom_call.1} parent=1 // pred_check
      _
    $region15: #{tpu_custom_call.1} parent=1 // pred_check_branch
      %39 = sbr.rel (0) target = $region17
    $region16: #{tpu_custom_call.1} parent=1 // pred_region
      _
    $region17: #{tpu_custom_call.1} parent=1 // pred_fallthru
      _
    // Predicated region
    $region18: #{tpu_custom_call.1} parent=1 // pred_check
      _
    $region19: #{tpu_custom_call.1} parent=1 // pred_check_branch
      %41 = sbr.rel (0) target = $region21
    $region20: #{tpu_custom_call.1} parent=1 // pred_region
      %43 = dma.done [#allocation3], 64
    $region21: #{tpu_custom_call.1} parent=1 // pred_fallthru
      _
    // Predicated region
    $region22: #{tpu_custom_call.1} parent=1 // pred_check
      _
    $region23: #{tpu_custom_call.1} parent=1 // pred_check_branch
      %45 = sbr.rel (0) target = $region25
    $region24: #{tpu_custom_call.1} parent=1 // pred_region
      %47 = dma.done [#allocation6], 128
    $region25: #{tpu_custom_call.1} parent=1 // pred_fallthru
      _
    %v49 = vld [vmem:[#allocation2] sm:$0xf]
    %v50 = vld [vmem:[#allocation5] sm:$0xf]
    %v51 = vld [vmem:[#allocation5 + $0x4] sm:$0x3]
    %v54 = vunpack.c.l.b16 %v50
    %v55 = vunpack.c.l.b16 %v51
    %v56 = vpack.c.b16 %v55, %v54
    %vm57 = vcmask 97280
    %v59 = vsel %vm57, %v49, 0
    %vm61 = vcmask 1045504
    %v63 = vsel %vm61, %v56, 0
    %65 = vmatpush.bf16.msra.mxu0 0
    %66 = vmatpush.bf16.msra.mxu0 0
    %67 = vmatpush.bf16.msra.mxu0 0
    %68 = vmatpush.bf16.msra.mxu0 0
    %69 = vmatpush.bf16.msra.mxu0 0
    %70 = vmatpush.bf16.msra.mxu0 0
    %71 = vmatpush.bf16.msra.mxu0 0
    %72 = vmatpush.bf16.msra.mxu0 %v63
    %73 = vmatmul.bf16.gmra.mxu0 %v59
    %v74 = vpop.f32.mrf.mxu0
    %v75 = vadd.f32 0.0, %v74
    %v76 = vpop.f32.mrf.mxu0
    %77 = vdwg.mxu0
    %v78 = vld [vmem:[%s2] sm:$0x1]
    %v80 = vperm.slane %v78, 0
    %v82 = vmul.f32 %v75, %v80
    %v83 = vld [vmem:[%s3] sm:$0x1]
    %v85 = vperm.slane %v83, 0
    %v87 = vadd.f32 %v82, %v85
    %v88 = vand.u32 2147483647, %v87
    %vm89 = vcmp.le.f32.partialorder %v88, 0.7853982
    %vm90 = vcmp.lt.s32.totalorder %v87, 0
    %v91 = vand.u32 %v87, 2139095040
    %v92 = vshrl.u32 %v91, 23
    %v93 = vsub.s32 %v92, 127
    %v94 = vand.u32 2147483647, %v87
    %v95 = vand.u32 %v94, 8388607
    %v96 = vor.u32 %v95, 8388608
    %v97 = vsub.s32 0, %v96
    %v98 = vadd.s32 %v93, 1
    %vm99 = vcmp.gt.s32.totalorder %v98, 0
    %v100 = vsel %vm99, %v98, 0
    %v101 = vshrl.u32 %v100, 5
    %v102 = vand.u32 %v100, 31
    %v103 = vsub.s32 32, %v102
    %v104 = vshrl.u32 683565275, %v103
    %v105 = vshll.u32 683565275, %v102
    %v106 = vshrl.u32 2475754826, %v103
    %v107 = vor.u32 %v105, %v106
    %v108 = vshll.u32 2475754826, %v102
    %v109 = vshrl.u32 2131351028, %v103
    %v110 = vor.u32 %v108, %v109
    %v111 = vshll.u32 2131351028, %v102
    %v112 = vshrl.u32 2102212464, %v103
    %v113 = vor.u32 %v111, %v112
    %v114 = vshll.u32 2102212464, %v102
    %v115 = vshrl.u32 920167782, %v103
    %v116 = vor.u32 %v114, %v115
    %v117 = vshll.u32 920167782, %v102
    %v118 = vshrl.u32 1326507024, %v103
    %v119 = vor.u32 %v117, %v118
    %vm120 = vcmp.lt.s32.totalorder %v101, 1
    %vm121 = vcmp.lt.s32.totalorder %v101, 2
    %vm122 = vcmp.lt.s32.totalorder %v101, 3
    %vm123 = vcmp.lt.s32.totalorder %v101, 4
    %v124 = vsel %vm120, %v104, %v107
    %v125 = vsel %vm123, %v113, 2102212464
    %v126 = vsel %vm122, %v110, %v125
    %v127 = vsel %vm121, %v124, %v126
    %v128 = vsel %vm120, %v107, %v110
    %v129 = vsel %vm123, %v116, 920167782
    %v130 = vsel %vm122, %v113, %v129
    %v131 = vsel %vm121, %v128, %v130
    %v132 = vsel %vm120, %v110, %v113
    %v133 = vsel %vm123, %v119, 1326507024
    %v134 = vsel %vm122, %v116, %v133
    %v135 = vsel %vm121, %v132, %v134
    %v136 = vshll.u32 %v96, 8
    %v137 = vand.u32 %v136, 65535
    %v138 = vshrl.u32 %v136, 16
    %v139 = vand.u32 %v135, 65535
    %v140 = vshrl.u32 %v135, 16
    %v141 = vmul.u32 %v137, %v139
    %v142 = vmul.u32 %v137, %v140
    %v143 = vmul.u32 %v138, %v139
    %v144 = vmul.u32 %v138, %v140
    %v145 = vshll.u32 %v142, 16
    %v146 = vshrl.u32 %v142, 16
    %v147 = vshll.u32 %v143, 16
    %v148 = vshrl.u32 %v143, 16
    %vm149 = vc.u32 %v141, %v145
    %v150 = vsel %vm149, 1, 0
    %v151 = vadd.s32 %v141, %v145
    %v152 = vadd.s32 %v144, %v150
    %vm153 = vc.u32 %v151, %v147
    %v154 = vsel %vm153, 1, 0
    %v155 = vadd.s32 %v151, %v147
    %v156 = vadd.s32 %v152, %v154
    %v157 = vadd.s32 %v156, %v146
    %v158 = vadd.s32 %v157, %v148
    %v159 = vand.u32 %v136, 65535
    %v160 = vshrl.u32 %v136, 16
    %v161 = vand.u32 %v131, 65535
    %v162 = vshrl.u32 %v131, 16
    %v163 = vmul.u32 %v159, %v161
    %v164 = vmul.u32 %v159, %v162
    %v165 = vmul.u32 %v160, %v161
    %v166 = vmul.u32 %v160, %v162
    %v167 = vshll.u32 %v164, 16
    %v168 = vshrl.u32 %v164, 16
    %v169 = vshll.u32 %v165, 16
    %v170 = vshrl.u32 %v165, 16
    %vm171 = vc.u32 %v163, %v167
    %v172 = vsel %vm171, 1, 0
    %v173 = vadd.s32 %v163, %v167
    %v174 = vadd.s32 %v166, %v172
    %vm175 = vc.u32 %v173, %v169
    %v176 = vsel %vm175, 1, 0
    %v177 = vadd.s32 %v173, %v169
    %v178 = vadd.s32 %v174, %v176
    %v179 = vadd.s32 %v178, %v168
    %v180 = vadd.s32 %v179, %v170
    %v181 = vmul.u32 %v136, %v127
    %v182 = vadd.s32 %v158, %v177
    %vm183 = vc.u32 %v158, %v177
    %v184 = vadd.s32 %v180, 1
    %v185 = vsel %vm183, %v184, %v180
    %v186 = vadd.s32 %v181, %v185
    %v187 = vadd.s32 %v186, 536870912
    %v188 = vshrl.u32 %v187, 30
    %v189 = vshll.u32 %v188, 30
    %v190 = vsub.s32 %v186, %v189
    %vm191 = vcmp.lt.s32.totalorder %v190, 0
    %v192 = vsub.s32 0, %v190
    %v193 = vsel %vm191, %v192, %v190
    %v194 = vclz %v193
    %v195 = vsub.s32 %v194, 2
    %vm196 = vcmp.gt.s32.totalorder 0, %v195
    %v197 = vsel %vm196, 0, %v195
    %v198 = vsub.s32 32, %v197
    %v199 = vshll.u32 %v190, %v197
    %v200 = vshrl.u32 %v182, %v198
    %v201 = vor.u32 %v199, %v200
    %v202 = vsub.s32 4294967266, %v197
    %v203 = vadd.s32 %v202, 127
    %v204 = vshll.u32 %v203, 23
    %v205 = vor.u32 4788187, %v204
    %v206 = vand.u32 2147483647, %v205
    %v208 = vcvt.s32.f32 %v201
    %v209 = vmul.f32 %v208, %v206
    %v210 = vxor.u32 %v209, 2147483648
    %v211 = vsel %vm90, %v210, %v209
    %v212 = vsub.s32 4, %v188
    %v213 = vsel %vm90, %v212, %v188
    %v214 = vsel %vm89, %v87, %v211
    %v215 = vsel %vm89, 0, %v213
    %v216 = vmul.f32 %v214, %v214
    %v217 = vmul.f32 %v216, -0.001358992
    %v218 = vadd.f32 %v217, 0.041655596
    %v219 = vmul.f32 %v216, %v218
    %v220 = vadd.f32 %v219, -0.4999988
    %v221 = vmul.f32 %v216, %v220
    %v222 = vadd.f32 1.0, %v221
    %v223 = vmul.f32 %v214, %v214
    %v224 = vmul.f32 %v223, -0.00019511016
    %v225 = vadd.f32 %v224, 0.008332121
    %v226 = vmul.f32 %v223, %v225
    %v227 = vadd.f32 %v226, -0.16666654
    %v228 = vmul.f32 %v223, %v227
    %v229 = vadd.f32 %v228, 1.0
    %v230 = vmul.f32 %v229, %v214
    %vm231 = vweird.f32 %v87
    %v232 = vadd.s32 %v215, 3
    %v233 = vand.u32 %v232, 3
    %vm234 = vcmp.lt.s32.totalorder %v233, 2
    %vm235 = vcmp.eq.s32.totalorder %v233, 0
    %v236 = vxor.u32 %v230, 2147483648
    %v237 = vsel %vm235, %v222, %v236
    %vm238 = vcmp.eq.s32.totalorder %v233, 2
    %v239 = vxor.u32 %v222, 2147483648
    %v240 = vsel %vm238, %v239, %v230
    %v241 = vsel %vm234, %v237, %v240
    %v242 = vsel %vm231, nan, %v241
    %243 = vst [vmem:[#allocation7] sm:$0xff] %v242
    // Predicated region
    $region26: #{tpu_custom_call.1} parent=1 // pred_check
      _
    $region27: #{tpu_custom_call.1} parent=1 // pred_check_branch
      %245 = sbr.rel (0) target = $region29
    $region28: #{tpu_custom_call.1} parent=1 // pred_region
      %247 = vsyncadd [#allocation4], 0
      %s249 = sshll.u32 [#allocation7], 4
      %s250 = int_to_ptr.vmem [resolvable:$true] %s249
      %s251 = sshll.u32 %s4, 4
      %s252 = int_to_ptr.hbm [resolvable:$true] %s251
      %254 = dma.vmem_to_hbm [thread:$0]  %s250, 128, %s252, [#allocation4]
    $region29: #{tpu_custom_call.1} parent=1 // pred_fallthru
      _
    // Predicated region
    $region30: #{tpu_custom_call.1} parent=1 // pred_check
      _
    $region31: #{tpu_custom_call.1} parent=1 // pred_check_branch
      %256 = sbr.rel (0) target = $region33
    $region32: #{tpu_custom_call.1} parent=1 // pred_region
      %258 = dma.done [#allocation4], 128
    $region33: #{tpu_custom_call.1} parent=1 // pred_fallthru
      _
    %259 = vsyncpa [#allocation3], 1
    %260 = vsyncpa [#allocation6], 1
    %261 = vsyncpa [#allocation4], 1

</llo_original>
